<compile_context>
chip_gen: v7x
topology: tpu7x:2x2x1
jax: 0.10.0
libtpu: 0.0.40
codegen_flags: <defaults>
</compile_context>

<pallas_src>
import functools
import math

import jax
import jax.numpy as jnp
from jax.experimental import pallas as pl
from jax.experimental.pallas import tpu as pltpu


def _round_up(x, m):
    return (x + m - 1) // m * m


def _cdiv(a, b):
    return -(-a // b)


def _physical_vmem_bytes():
    """Best-effort physical VMEM per core (defaults to 128 MiB: v5e/v6e)."""
    try:
        info = pltpu.get_tpu_info()
        v = int(getattr(info, "vmem_capacity_bytes", 0))
        if v > 0:
            return v
    except Exception:
        pass
    return 128 << 20


def _tensorcores_per_chip():
    """Best-effort TensorCores-per-chip (v7x and v4/v5p megacore have 2)."""
    try:
        kind = jax.devices()[0].device_kind.lower()
    except Exception:
        return 1
    if "v7" in kind or "v4" in kind or "v5p" in kind:
        return 2
    return 1


def _pick_n_sub(tile_m):
    """2-4 sub-blocks per token tile so sin() of block j+1 overlaps the matmuls of j."""
    for n in (4, 2):
        sub = tile_m // n
        if tile_m % n == 0 and sub % 16 == 0 and sub >= 64:
            return n
    return 1


def au_prompt_kernel(t_ref, consts_ref, w1_ref, w2_ref, o_ref, *, n_sub, sub_m):
    # t_ref:      [TM, 1]   timesteps for this tile of tokens
    # consts_ref: [4, D]    row0 = freqs++freqs, row1 = phase (0 | pi/2), row2 = b1, row3 = b2
    # w1/w2:      [D, D]    compute dtype (bf16), resident across the grid
    # o_ref:      [TM, D]
    c = consts_ref[...]
    freqs = c[0:1, :]
    phase = c[1:2, :]
    b1 = c[2:3, :]
    b2 = c[3:4, :]
    w1 = w1_ref[...]
    w2 = w2_ref[...]

    # Unrolled sub-blocks in a single basic block: the LLO scheduler can overlap the
    # VPU-heavy sin() of one sub-block with the MXU matmuls of another.
    for j in range(n_sub):
        r0 = j * sub_m
        t = t_ref[r0:r0 + sub_m, :].astype(jnp.float32)            # [sub_m, 1]
        args = t * freqs + phase                                   # [sub_m, D]
        emb = jnp.sin(args)                                        # sin half | cos half (+pi/2)
        h = jnp.dot(emb.astype(w1.dtype), w1,
                    preferred_element_type=jnp.float32) + b1
        h = jnp.maximum(h, 0.0)                                    # ReLU
        out = jnp.dot(h.astype(w2.dtype), w2,
                      preferred_element_type=jnp.float32) + b2
        o_ref[r0:r0 + sub_m, :] = out.astype(o_ref.dtype)


def au_to_prompt_embed(au_diff, params, *, embed_dim, freq_shift=1.0,
                       max_period=10000, tile_m=None,
                       compute_dtype=jnp.bfloat16, out_dtype=jnp.float32):
    """au_diff: [B, S] float. Returns [B, S, embed_dim] in out_dtype."""
    B, S = au_diff.shape
    D = embed_dim
    H = D // 2
    assert D % 2 == 0, "even embed_dim only"
    # TODO(synk): odd embed_dim zero-pad column (F.pad in the reference) not implemented.

    # Grid-invariant constants, merged into one (4, D) f32 operand.
    exponent = -math.log(max_period) * jnp.arange(H, dtype=jnp.float32)
    exponent = exponent / (H - freq_shift)
    freqs = jnp.exp(exponent)
    freqs_full = jnp.concatenate([freqs, freqs])                              # [D]
    phase = jnp.concatenate([jnp.zeros((H,), jnp.float32),
                             jnp.full((H,), 0.5 * math.pi, jnp.float32)])     # [D]
    w1, b1, w2, b2 = params
    consts = jnp.stack([freqs_full, phase,
                        b1.reshape(D).astype(jnp.float32),
                        b2.reshape(D).astype(jnp.float32)], axis=0)           # [4, D]
    w1c = w1.astype(compute_dtype)
    w2c = w2.astype(compute_dtype)

    # ---- token tiling: balanced tiles, multiple of 16 (bf16 sublane packing) ----
    M = B * S
    cores = _tensorcores_per_chip()
    cap = 1024
    if tile_m is None:
        n_tiles = max(1, _cdiv(M, cap))
        if cores >= 2 and M >= 32:
            n_tiles = max(n_tiles, 2)            # keep both TensorCores busy (v7x / megacore)
        tm = _cdiv(M, n_tiles)
        tile_m = _round_up(tm, 64) if tm >= 64 else _round_up(tm, 16)
    else:
        tile_m = _round_up(tile_m, 16)
    tile_m = max(16, tile_m)

    D_lane = _round_up(D, 128)
    w_itemsize = jnp.dtype(compute_dtype).itemsize
    out_itemsize = jnp.dtype(out_dtype).itemsize

    def vmem_needed(tm_):
        return (2 * 2 * D * D_lane * w_itemsize      # W1 + W2, double-buffered (one DMA each)
                + 2 * 8 * D_lane * 4                 # (4,D) consts padded to 8 sublanes, x2 bufs
                + 2 * tm_ * 128 * 4                  # (tile_m,1) timestep block, lane-padded
                + 2 * tm_ * D_lane * out_itemsize    # output block, double-buffered
                + 6 * tm_ * D_lane * 4)              # f32 intermediates (args/emb/h/out) headroom

    phys_vmem = _physical_vmem_bytes()
    vmem_cap = (phys_vmem * 3) // 4                  # ~96 MiB on v5e/v6e, ~48 MiB on v7x
    # Shrink the token tile if the budget does not fit (weights stay resident).
    while tile_m > 64 and vmem_needed(tile_m) + (4 << 20) > vmem_cap:
        tile_m = max(64, _round_up(tile_m // 2, 16))
    # TODO(synk): for D >~ 3k on v7x (64 MiB VMEM) the resident bf16 weights themselves no
    # longer fit; an N-tiled weight path (second grid axis) or fp8 weights would be needed.

    M_pad = _round_up(M, tile_m)
    grid = (M_pad // tile_m,)
    n_sub = _pick_n_sub(tile_m)
    sub_m = tile_m // n_sub

    t = au_diff.reshape(M).astype(jnp.float32)
    if M_pad != M:
        t = jnp.pad(t, (0, M_pad - M))
    t = t.reshape(M_pad, 1)

    vmem_limit = int(min(max(vmem_needed(tile_m) + (4 << 20), 16 << 20), vmem_cap))

    cost = pl.CostEstimate(
        flops=4 * M_pad * D * D,                     # two (M,D)x(D,D) matmuls
        transcendentals=M_pad * D,                   # one sin per embedding element
        bytes_accessed=(M_pad * 4 + 2 * D * D * w_itemsize + 4 * D * 4
                        + M_pad * D * out_itemsize),
    )

    kernel = functools.partial(au_prompt_kernel, n_sub=n_sub, sub_m=sub_m)
    const_map = lambda i: (0, 0)
    out_flat = pl.pallas_call(
        kernel,
        out_shape=jax.ShapeDtypeStruct((M_pad, D), out_dtype),
        grid_spec=pltpu.PrefetchScalarGridSpec(
            num_scalar_prefetch=0,
            grid=grid,
            in_specs=[
                pl.BlockSpec((tile_m, 1), lambda i: (i, 0)),     # timesteps tile
                pl.BlockSpec((4, D), const_map),                 # freqs | phase | b1 | b2
                pl.BlockSpec((D, D), const_map),                 # W1 (whole, resident)
                pl.BlockSpec((D, D), const_map),                 # W2 (whole, resident)
            ],
            out_specs=pl.BlockSpec((tile_m, D), lambda i: (i, 0)),
        ),
        compiler_params=pltpu.CompilerParams(
            dimension_semantics=("parallel",),
            vmem_limit_bytes=vmem_limit,
        ),
        cost_estimate=cost,
    )(t, consts, w1c, w2c)

    return out_flat[:M].reshape(B, S, D)


def init_params(key, embed_dim):
    """Deterministic synthetic params for the two Linear layers.
    Weights stored as [in, out] so the kernel computes x @ W + b."""
    D = embed_dim
    k1, k2, k3, k4 = jax.random.split(key, 4)
    scale = 1.0 / math.sqrt(D)
    w1 = jax.random.uniform(k1, (D, D), jnp.float32, -scale, scale)
    b1 = jax.random.uniform(k2, (1, D), jnp.float32, -scale, scale)
    w2 = jax.random.uniform(k3, (D, D), jnp.float32, -scale, scale)
    b2 = jax.random.uniform(k4, (1, D), jnp.float32, -scale, scale)
    return (w1, b1, w2, b2)


def reference(au_diff, params, *, embed_dim, freq_shift=1.0, max_period=10000,
              compute_dtype=jnp.float32):
    """Pure-JAX reference. compute_dtype emulates the kernel's bf16 matmul inputs."""
    D = embed_dim
    H = D // 2
    exponent = -math.log(max_period) * jnp.arange(H, dtype=jnp.float32) / (H - freq_shift)
    freqs = jnp.exp(exponent)
    args = au_diff[..., None].astype(jnp.float32) * freqs            # [B, S, H]
    emb = jnp.concatenate([jnp.sin(args), jnp.cos(args)], axis=-1)   # [B, S, D]
    w1, b1, w2, b2 = params
    cd = compute_dtype
    h = jnp.dot(emb.astype(cd), w1.astype(cd),
                preferred_element_type=jnp.float32) + b1[0]
    h = jnp.maximum(h, 0.0)
    return jnp.dot(h.astype(cd), w2.astype(cd),
                   preferred_element_type=jnp.float32) + b2[0]


if __name__ == "__main__":
    key = jax.random.PRNGKey(0)
    k_in, k_par = jax.random.split(key)

    # Small shapes consistent with the module: au_diff is [B, S]
    B, S = 2, 8
    embed_dim = 256
    freq_shift = 1.0

    au_diff = jax.random.normal(k_in, (B, S), jnp.float32) * 3.0
    params = init_params(k_par, embed_dim)

    out = au_to_prompt_embed(au_diff, params, embed_dim=embed_dim,
                             freq_shift=freq_shift)
    out = jax.block_until_ready(out)

    ref = reference(au_diff, params, embed_dim=embed_dim, freq_shift=freq_shift,
                    compute_dtype=jnp.bfloat16)
    assert out.shape == (B, S, embed_dim)
    max_err = float(jnp.max(jnp.abs(out - ref)))
    assert jnp.allclose(out, ref, atol=1e-2, rtol=1e-2), (
        f"mismatch vs JAX reference, max abs err = {max_err}")

    print("KERNEL_OK")
</pallas_src>

<mosaic_0001>
module attributes {stable_mosaic.version = 11 : i64} {
  func.func @au_prompt_kernel(%arg0: i32, %arg1: memref<16x1xf32, #tpu.memory_space<vmem>>, %arg2: memref<4x256xf32, #tpu.memory_space<vmem>>, %arg3: memref<256x256xbf16, #tpu.memory_space<vmem>>, %arg4: memref<256x256xbf16, #tpu.memory_space<vmem>>, %arg5: memref<16x256xf32, #tpu.memory_space<vmem>>) attributes {dimension_semantics = [#tpu.dimension_semantics<parallel>], iteration_bounds = array<i64: 1>, scalar_prefetch = 0 : i64, scratch_operands = 0 : i64, tpu.core_type = #tpu.core_type<tc>, window_params = [{transform_indices = @transform_0, window_bounds = array<i64: 16, 1>}, {pipeline_mode = #tpu.pipeline_mode<synchronous>, transform_indices = @transform_1, window_bounds = array<i64: 4, 256>}, {pipeline_mode = #tpu.pipeline_mode<synchronous>, transform_indices = @transform_2, window_bounds = array<i64: 256, 256>}, {pipeline_mode = #tpu.pipeline_mode<synchronous>, transform_indices = @transform_3, window_bounds = array<i64: 256, 256>}, {transform_indices = @transform_4, window_bounds = array<i64: 16, 256>}]} {
    %c0 = arith.constant 0 : index
    %c0_0 = arith.constant 0 : index
    %0 = vector.load %arg2[%c0, %c0_0] : memref<4x256xf32, #tpu.memory_space<vmem>>, vector<4x256xf32>
    %1 = vector.extract_strided_slice %0 {offsets = [0, 0], sizes = [1, 256], strides = [1, 1]} : vector<4x256xf32> to vector<1x256xf32>
    %2 = vector.extract_strided_slice %0 {offsets = [1, 0], sizes = [1, 256], strides = [1, 1]} : vector<4x256xf32> to vector<1x256xf32>
    %3 = vector.extract_strided_slice %0 {offsets = [2, 0], sizes = [1, 256], strides = [1, 1]} : vector<4x256xf32> to vector<1x256xf32>
    %4 = vector.extract_strided_slice %0 {offsets = [3, 0], sizes = [1, 256], strides = [1, 1]} : vector<4x256xf32> to vector<1x256xf32>
    %c0_1 = arith.constant 0 : index
    %c0_2 = arith.constant 0 : index
    %5 = vector.load %arg3[%c0_1, %c0_2] : memref<256x256xbf16, #tpu.memory_space<vmem>>, vector<256x256xbf16>
    %c0_3 = arith.constant 0 : index
    %c0_4 = arith.constant 0 : index
    %6 = vector.load %arg4[%c0_3, %c0_4] : memref<256x256xbf16, #tpu.memory_space<vmem>>, vector<256x256xbf16>
    %c0_5 = arith.constant 0 : index
    %c0_6 = arith.constant 0 : index
    %7 = vector.load %arg1[%c0_5, %c0_6] : memref<16x1xf32, #tpu.memory_space<vmem>>, vector<16x1xf32>
    %8 = vector.broadcast %7 : vector<16x1xf32> to vector<16x256xf32>
    %9 = vector.broadcast %1 : vector<1x256xf32> to vector<16x256xf32>
    %10 = arith.mulf %8, %9 : vector<16x256xf32>
    %11 = vector.broadcast %2 : vector<1x256xf32> to vector<16x256xf32>
    %12 = arith.addf %10, %11 : vector<16x256xf32>
    %13 = math.sin %12 : vector<16x256xf32>
    %14 = arith.truncf %13 : vector<16x256xf32> to vector<16x256xbf16>
    %cst = arith.constant dense<0.000000e+00> : vector<16x256xf32>
    %15 = tpu.matmul %14, %5, %cst {dimension_numbers = #tpu.dot_dimension_numbers<[1], [0], [0], [1], [0, 0, 1, 1], [], []>} : vector<16x256xbf16>, vector<256x256xbf16>, vector<16x256xf32> -> vector<16x256xf32>
    %16 = vector.broadcast %3 : vector<1x256xf32> to vector<16x256xf32>
    %17 = arith.addf %15, %16 : vector<16x256xf32>
    %cst_7 = arith.constant 0.000000e+00 : f32
    %18 = vector.broadcast %cst_7 : f32 to vector<16x256xf32>
    %19 = arith.maximumf %17, %18 : vector<16x256xf32>
    %20 = arith.truncf %19 : vector<16x256xf32> to vector<16x256xbf16>
    %cst_8 = arith.constant dense<0.000000e+00> : vector<16x256xf32>
    %21 = tpu.matmul %20, %6, %cst_8 {dimension_numbers = #tpu.dot_dimension_numbers<[1], [0], [0], [1], [0, 0, 1, 1], [], []>} : vector<16x256xbf16>, vector<256x256xbf16>, vector<16x256xf32> -> vector<16x256xf32>
    %22 = vector.broadcast %4 : vector<1x256xf32> to vector<16x256xf32>
    %23 = arith.addf %21, %22 : vector<16x256xf32>
    %c0_9 = arith.constant 0 : index
    %c0_10 = arith.constant 0 : index
    %24 = vector.load %arg5[%c0_9, %c0_10] : memref<16x256xf32, #tpu.memory_space<vmem>>, vector<16x256xf32>
    tpu.vector_store %arg5[%c0_9, %c0_10], %23 {strides = array<i32>} : memref<16x256xf32, #tpu.memory_space<vmem>>, vector<16x256xf32>,
    return
  }
  func.func @transform_0(%arg0: i32) -> (i32, i32) {
    %c0_i32 = arith.constant 0 : i32
    %c0_i32_0 = arith.constant 0 : i32
    return %arg0, %c0_i32 : i32, i32
  }
  func.func @transform_1(%arg0: i32) -> (i32, i32) {
    %c0_i32 = arith.constant 0 : i32
    %c0_i32_0 = arith.constant 0 : i32
    %c0_i32_1 = arith.constant 0 : i32
    return %c0_i32, %c0_i32_0 : i32, i32
  }
  func.func @transform_2(%arg0: i32) -> (i32, i32) {
    %c0_i32 = arith.constant 0 : i32
    %c0_i32_0 = arith.constant 0 : i32
    %c0_i32_1 = arith.constant 0 : i32
    return %c0_i32, %c0_i32_0 : i32, i32
  }
  func.func @transform_3(%arg0: i32) -> (i32, i32) {
    %c0_i32 = arith.constant 0 : i32
    %c0_i32_0 = arith.constant 0 : i32
    %c0_i32_1 = arith.constant 0 : i32
    return %c0_i32, %c0_i32_0 : i32, i32
  }
  func.func @transform_4(%arg0: i32) -> (i32, i32) {
    %c0_i32 = arith.constant 0 : i32
    %c0_i32_0 = arith.constant 0 : i32
    return %arg0, %c0_i32 : i32, i32
  }
}

</mosaic_0001>

<llo_original>
// kernel: tpu_custom_call.1
$region0: #{tpu_custom_call.1}
  #allocation0 [shape = 'u32[]', space=smem, size = 0x4, offset = 0x4, fixed_abs, tag = 'smem constant byte address 0x4 - core index']
  #allocation1 [shape = 'u32[144,128]{1,0:T(1,128)}', space=vmem, size = 0x12000, scoped, tag = 'internal scratch']
  %s0 = inlined_call_operand.vmem [shape: f32[16,1], index: 0, kind: input, shape index: {}]
  %s1 = inlined_call_operand.vmem [shape: f32[4,256], index: 1, kind: input, shape index: {}]
  %s2 = inlined_call_operand.hbm [shape: bf16[256,256], index: 2, kind: input, shape index: {}]
  %s3 = inlined_call_operand.hbm [shape: bf16[256,256], index: 3, kind: input, shape index: {}]
  %s4 = inlined_call_operand.hbm [shape: f32[16,256], index: 4, kind: output, shape index: {}]
  %s5 = sld [smem:[#allocation0]]
  $region34: #{tpu_custom_call.1} parent=0
    _
  %s7 = ssub.s32 1, %s5
  %s8 = scalar_select 0, %s7, %s5
  $region1: #{tpu_custom_call.1} parent=0
    #allocation2 [shape = 'u8[131072]{0}', space=vmem, size = 0x20000, scoped, tag = 'input window, operand 2, single buffered']
    #allocation3 [shape = 's32[1]{0}', space=sflag, size = 0x4, scoped, tag = 'scoped memory for tpu_custom_call.1']
    #allocation4 [shape = 's32[1]{0}', space=sflag, size = 0x4, scoped, tag = 'scoped memory for tpu_custom_call.1']
    #allocation5 [shape = 'u8[131072]{0}', space=vmem, size = 0x20000, scoped, tag = 'input window, operand 3, single buffered']
    #allocation6 [shape = 's32[1]{0}', space=sflag, size = 0x4, scoped, tag = 'scoped memory for tpu_custom_call.1']
    #allocation7 [shape = 'u8[16384]{0}', space=vmem, size = 0x4000, scoped, tag = 'output window, operand 0, single buffered']
    %9 = vsyncpa [#allocation3], 0
    %10 = vsyncpa [#allocation6], 0
    %11 = vsyncpa [#allocation4], 0
    // Predicated region
    $region2: #{tpu_custom_call.1} parent=1 // pred_check
      _
    $region3: #{tpu_custom_call.1} parent=1 // pred_check_branch
      %13 = sbr.rel (0) target = $region5
    $region4: #{tpu_custom_call.1} parent=1 // pred_region
      _
    $region5: #{tpu_custom_call.1} parent=1 // pred_fallthru
      _
    // Predicated region
    $region6: #{tpu_custom_call.1} parent=1 // pred_check
      _
    $region7: #{tpu_custom_call.1} parent=1 // pred_check_branch
      %15 = sbr.rel (0) target = $region9
    $region8: #{tpu_custom_call.1} parent=1 // pred_region
      _
    $region9: #{tpu_custom_call.1} parent=1 // pred_fallthru
      _
    // Predicated region
    $region10: #{tpu_custom_call.1} parent=1 // pred_check
      _
    $region11: #{tpu_custom_call.1} parent=1 // pred_check_branch
      %17 = sbr.rel (0) target = $region13
    $region12: #{tpu_custom_call.1} parent=1 // pred_region
      %s19 = ssub.s32 4096, 4096
      %20 = vsyncadd [#allocation3], %s19
      %s21 = sshll.u32 [#allocation2], 4
      %s22 = int_to_ptr.vmem [resolvable:$true] %s21
      %27 = dma.hbm_to_vmem [thread:$0]  %s2, 4096, %s22, [#allocation3], 128, 128, 8
    $region13: #{tpu_custom_call.1} parent=1 // pred_fallthru
      _
    // Predicated region
    $region14: #{tpu_custom_call.1} parent=1 // pred_check
      _
    $region15: #{tpu_custom_call.1} parent=1 // pred_check_branch
      %29 = sbr.rel (0) target = $region17
    $region16: #{tpu_custom_call.1} parent=1 // pred_region
      %s31 = ssub.s32 4096, 4096
      %32 = vsyncadd [#allocation6], %s31
      %s33 = sshll.u32 [#allocation5], 4
      %s34 = int_to_ptr.vmem [resolvable:$true] %s33
      %39 = dma.hbm_to_vmem [thread:$0]  %s3, 4096, %s34, [#allocation6], 128, 128, 8
    $region17: #{tpu_custom_call.1} parent=1 // pred_fallthru
      _
    // Predicated region
    $region18: #{tpu_custom_call.1} parent=1 // pred_check
      _
    $region19: #{tpu_custom_call.1} parent=1 // pred_check_branch
      %41 = sbr.rel (0) target = $region21
    $region20: #{tpu_custom_call.1} parent=1 // pred_region
      %42 = dma.done [#allocation3], 4096
    $region21: #{tpu_custom_call.1} parent=1 // pred_fallthru
      _
    // Predicated region
    $region22: #{tpu_custom_call.1} parent=1 // pred_check
      _
    $region23: #{tpu_custom_call.1} parent=1 // pred_check_branch
      %44 = sbr.rel (0) target = $region25
    $region24: #{tpu_custom_call.1} parent=1 // pred_region
      %45 = dma.done [#allocation6], 4096
    $region25: #{tpu_custom_call.1} parent=1 // pred_fallthru
      _
    %v46 = vld [vmem:[%s1] sm:$0xff]
    %v47 = vld [vmem:[#allocation2] sm:$0xff]
    %v48 = vld [vmem:[#allocation2 + $0x8] sm:$0xff]
    %v49 = vld [vmem:[#allocation2 + $0x10] sm:$0xff]
    %v50 = vld [vmem:[#allocation2 + $0x18] sm:$0xff]
    %v51 = vld [vmem:[#allocation2 + $0x20] sm:$0xff]
    %v52 = vld [vmem:[#allocation2 + $0x28] sm:$0xff]
    %v53 = vld [vmem:[#allocation2 + $0x30] sm:$0xff]
    %v54 = vld [vmem:[#allocation2 + $0x38] sm:$0xff]
    %v55 = vld [vmem:[#allocation2 + $0x40] sm:$0xff]
    %v56 = vld [vmem:[#allocation2 + $0x48] sm:$0xff]
    %v57 = vld [vmem:[#allocation2 + $0x50] sm:$0xff]
    %v58 = vld [vmem:[#allocation2 + $0x58] sm:$0xff]
    %v59 = vld [vmem:[#allocation2 + $0x60] sm:$0xff]
    %v60 = vld [vmem:[#allocation2 + $0x68] sm:$0xff]
    %v61 = vld [vmem:[#allocation2 + $0x70] sm:$0xff]
    %v62 = vld [vmem:[#allocation2 + $0x78] sm:$0xff]
    %v63 = vld [vmem:[#allocation2 + $0x80] sm:$0xff]
    %v64 = vld [vmem:[#allocation2 + $0x88] sm:$0xff]
    %v65 = vld [vmem:[#allocation2 + $0x90] sm:$0xff]
    %v66 = vld [vmem:[#allocation2 + $0x98] sm:$0xff]
    %v67 = vld [vmem:[#allocation2 + $0xa0] sm:$0xff]
    %v68 = vld [vmem:[#allocation2 + $0xa8] sm:$0xff]
    %v69 = vld [vmem:[#allocation2 + $0xb0] sm:$0xff]
    %v70 = vld [vmem:[#allocation2 + $0xb8] sm:$0xff]
    %v71 = vld [vmem:[#allocation2 + $0xc0] sm:$0xff]
    %v72 = vld [vmem:[#allocation2 + $0xc8] sm:$0xff]
    %v73 = vld [vmem:[#allocation2 + $0xd0] sm:$0xff]
    %v74 = vld [vmem:[#allocation2 + $0xd8] sm:$0xff]
    %v75 = vld [vmem:[#allocation2 + $0xe0] sm:$0xff]
    %v76 = vld [vmem:[#allocation2 + $0xe8] sm:$0xff]
    %v77 = vld [vmem:[#allocation2 + $0xf0] sm:$0xff]
    %v78 = vld [vmem:[#allocation2 + $0xf8] sm:$0xff]
    %v79 = vld [vmem:[#allocation5] sm:$0xff]
    %v80 = vld [vmem:[#allocation5 + $0x8] sm:$0xff]
    %v81 = vld [vmem:[#allocation5 + $0x10] sm:$0xff]
    %v82 = vld [vmem:[#allocation5 + $0x18] sm:$0xff]
    %v83 = vld [vmem:[#allocation5 + $0x20] sm:$0xff]
    %v84 = vld [vmem:[#allocation5 + $0x28] sm:$0xff]
    %v85 = vld [vmem:[#allocation5 + $0x30] sm:$0xff]
    %v86 = vld [vmem:[#allocation5 + $0x38] sm:$0xff]
    %v87 = vld [vmem:[#allocation5 + $0x40] sm:$0xff]
    %v88 = vld [vmem:[#allocation5 + $0x48] sm:$0xff]
    %v89 = vld [vmem:[#allocation5 + $0x50] sm:$0xff]
    %v90 = vld [vmem:[#allocation5 + $0x58] sm:$0xff]
    %v91 = vld [vmem:[#allocation5 + $0x60] sm:$0xff]
    %v92 = vld [vmem:[#allocation5 + $0x68] sm:$0xff]
    %v93 = vld [vmem:[#allocation5 + $0x70] sm:$0xff]
    %v94 = vld [vmem:[#allocation5 + $0x78] sm:$0xff]
    %v95 = vld [vmem:[#allocation5 + $0x80] sm:$0xff]
    %v96 = vld [vmem:[#allocation5 + $0x88] sm:$0xff]
    %v97 = vld [vmem:[#allocation5 + $0x90] sm:$0xff]
    %v98 = vld [vmem:[#allocation5 + $0x98] sm:$0xff]
    %v99 = vld [vmem:[#allocation5 + $0xa0] sm:$0xff]
    %v100 = vld [vmem:[#allocation5 + $0xa8] sm:$0xff]
    %v101 = vld [vmem:[#allocation5 + $0xb0] sm:$0xff]
    %v102 = vld [vmem:[#allocation5 + $0xb8] sm:$0xff]
    %v103 = vld [vmem:[#allocation5 + $0xc0] sm:$0xff]
    %v104 = vld [vmem:[#allocation5 + $0xc8] sm:$0xff]
    %v105 = vld [vmem:[#allocation5 + $0xd0] sm:$0xff]
    %v106 = vld [vmem:[#allocation5 + $0xd8] sm:$0xff]
    %v107 = vld [vmem:[#allocation5 + $0xe0] sm:$0xff]
    %v108 = vld [vmem:[#allocation5 + $0xe8] sm:$0xff]
    %v109 = vld [vmem:[#allocation5 + $0xf0] sm:$0xff]
    %v110 = vld [vmem:[#allocation5 + $0xf8] sm:$0xff]
    %v111 = vld [vmem:[%s0] sm:$0xff]
    %v112 = vld [vmem:[%s0 + $0x8] sm:$0xff]
    %114 = vset.pattern.permute.xlu0 0
    %115 = vperm.xlu0 %114, %v111
    %v116 = vpop.permute.xlu0 %115
    %119 = vset.pattern.permute.xlu0 0
    %120 = vperm.xlu0 %119, %v112
    %v121 = vpop.permute.xlu0 %120
    %v124 = vlaneseq
    %v125 = vshrl.u32 %v124, 7
    %v126 = vsub.s32 0, %v125
    %v127 = vrot.slane %v46, %v126
    %v128 = vlaneseq
    %v129 = vshrl.u32 %v128, 7
    %v130 = vsub.s32 4, %v129
    %v131 = vrot.slane %v46, %v130
    %v134 = vlaneseq
    %v135 = vshrl.u32 %v134, 7
    %v136 = vsub.s32 0, %v135
    %v137 = vrot.slane %v127, %v136
    %v138 = vlaneseq
    %v139 = vshrl.u32 %v138, 7
    %v140 = vsub.s32 0, %v139
    %v141 = vrot.slane %v131, %v140
    %v142 = vmul.f32 %v116, %v137
    %v143 = vmul.f32 %v116, %v141
    %v144 = vmul.f32 %v121, %v137
    %v145 = vmul.f32 %v121, %v141
    %v146 = vlaneseq
    %v147 = vshrl.u32 %v146, 7
    %v148 = vsub.s32 1, %v147
    %v149 = vrot.slane %v46, %v148
    %v150 = vlaneseq
    %v151 = vshrl.u32 %v150, 7
    %v152 = vsub.s32 5, %v151
    %v153 = vrot.slane %v46, %v152
    %v156 = vlaneseq
    %v157 = vshrl.u32 %v156, 7
    %v158 = vsub.s32 1, %v157
    %v159 = vrot.slane %v149, %v158
    %v160 = vlaneseq
    %v161 = vshrl.u32 %v160, 7
    %v162 = vsub.s32 1, %v161
    %v163 = vrot.slane %v153, %v162
    %v164 = vadd.f32 %v142, %v159
    %v165 = vadd.f32 %v143, %v163
    %v166 = vadd.f32 %v144, %v159
    %v167 = vadd.f32 %v145, %v163
    %v168 = vand.u32 2147483647, %v164
    %vm169 = vcmp.le.f32.partialorder %v168, 0.7853982
    %vm170 = vcmp.lt.s32.totalorder %v164, 0
    %v171 = vand.u32 %v164, 2139095040
    %v172 = vshrl.u32 %v171, 23
    %v173 = vsub.s32 %v172, 127
    %v174 = vand.u32 2147483647, %v164
    %v175 = vand.u32 %v174, 8388607
    %v176 = vor.u32 %v175, 8388608
    %v177 = vsub.s32 0, %v176
    %v178 = vadd.s32 %v173, 1
    %vm179 = vcmp.gt.s32.totalorder %v178, 0
    %v180 = vsel %vm179, %v178, 0
    %v181 = vshrl.u32 %v180, 5
    %v182 = vand.u32 %v180, 31
    %v183 = vsub.s32 32, %v182
    %v184 = vshrl.u32 683565275, %v183
    %v185 = vshll.u32 683565275, %v182
    %v186 = vshrl.u32 2475754826, %v183
    %v187 = vor.u32 %v185, %v186
    %v188 = vshll.u32 2475754826, %v182
    %v189 = vshrl.u32 2131351028, %v183
    %v190 = vor.u32 %v188, %v189
    %v191 = vshll.u32 2131351028, %v182
    %v192 = vshrl.u32 2102212464, %v183
    %v193 = vor.u32 %v191, %v192
    %v194 = vshll.u32 2102212464, %v182
    %v195 = vshrl.u32 920167782, %v183
    %v196 = vor.u32 %v194, %v195
    %v197 = vshll.u32 920167782, %v182
    %v198 = vshrl.u32 1326507024, %v183
    %v199 = vor.u32 %v197, %v198
    %vm200 = vcmp.lt.s32.totalorder %v181, 1
    %vm201 = vcmp.lt.s32.totalorder %v181, 2
    %vm202 = vcmp.lt.s32.totalorder %v181, 3
    %vm203 = vcmp.lt.s32.totalorder %v181, 4
    %v204 = vsel %vm200, %v184, %v187
    %v205 = vsel %vm203, %v193, 2102212464
    %v206 = vsel %vm202, %v190, %v205
    %v207 = vsel %vm201, %v204, %v206
    %v208 = vsel %vm200, %v187, %v190
    %v209 = vsel %vm203, %v196, 920167782
    %v210 = vsel %vm202, %v193, %v209
    %v211 = vsel %vm201, %v208, %v210
    %v212 = vsel %vm200, %v190, %v193
    %v213 = vsel %vm203, %v199, 1326507024
    %v214 = vsel %vm202, %v196, %v213
    %v215 = vsel %vm201, %v212, %v214
    %v216 = vshll.u32 %v176, 8
    %v217 = vmul.u32.u64.compose %v216, %v215
    %v218 = vextract.low.u32 %v217
    %v219 = vextract.high.u32 %v217
    %v220 = vmul.u32.u64.compose %v216, %v211
    %v221 = vextract.low.u32 %v220
    %v222 = vextract.high.u32 %v220
    %v223 = vmul.u32 %v216, %v207
    %v224 = vadd.s32 %v219, %v221
    %vm225 = vc.u32 %v219, %v221
    %v226 = vadd.s32 %v222, 1
    %v227 = vsel %vm225, %v226, %v222
    %v228 = vadd.s32 %v223, %v227
    %v229 = vadd.s32 %v228, 536870912
    %v230 = vshrl.u32 %v229, 30
    %v231 = vshll.u32 %v230, 30
    %v232 = vsub.s32 %v228, %v231
    %vm233 = vcmp.lt.s32.totalorder %v232, 0
    %v234 = vsub.s32 0, %v232
    %v235 = vsel %vm233, %v234, %v232
    %v236 = vclz %v235
    %v237 = vsub.s32 %v236, 2
    %vm238 = vcmp.gt.s32.totalorder 0, %v237
    %v239 = vsel %vm238, 0, %v237
    %v240 = vsub.s32 32, %v239
    %v241 = vshll.u32 %v232, %v239
    %v242 = vshrl.u32 %v224, %v240
    %v243 = vor.u32 %v241, %v242
    %v244 = vsub.s32 4294967266, %v239
    %v245 = vadd.s32 %v244, 127
    %v246 = vshll.u32 %v245, 23
    %v247 = vor.u32 4788187, %v246
    %v248 = vand.u32 2147483647, %v247
    %v250 = vcvt.s32.f32 %v243
    %v251 = vmul.f32 %v250, %v248
    %v252 = vxor.u32 %v251, 2147483648
    %v253 = vsel %vm170, %v252, %v251
    %v254 = vsub.s32 4, %v230
    %v255 = vsel %vm170, %v254, %v230
    %v256 = vsel %vm169, %v164, %v253
    %v257 = vsel %vm169, 0, %v255
    %v258 = vcosq.f32.pop %v256
    %v259 = vsinq.f32.pop %v256
    %vm260 = vweird.f32 %v164
    %v261 = vadd.s32 %v257, 3
    %v262 = vand.u32 %v261, 3
    %vm263 = vcmp.lt.s32.totalorder %v262, 2
    %vm264 = vcmp.eq.s32.totalorder %v262, 0
    %v265 = vxor.u32 %v259, 2147483648
    %v266 = vsel %vm264, %v258, %v265
    %vm267 = vcmp.eq.s32.totalorder %v262, 2
    %v268 = vxor.u32 %v258, 2147483648
    %v269 = vsel %vm267, %v268, %v259
    %v270 = vsel %vm263, %v266, %v269
    %v271 = vsel %vm260, nan, %v270
    %v272 = vand.u32 2147483647, %v165
    %vm273 = vcmp.le.f32.partialorder %v272, 0.7853982
    %vm274 = vcmp.lt.s32.totalorder %v165, 0
    %v275 = vand.u32 %v165, 2139095040
    %v276 = vshrl.u32 %v275, 23
    %v277 = vsub.s32 %v276, 127
    %v278 = vand.u32 2147483647, %v165
    %v279 = vand.u32 %v278, 8388607
    %v280 = vor.u32 %v279, 8388608
    %v281 = vsub.s32 0, %v280
    %v282 = vadd.s32 %v277, 1
    %vm283 = vcmp.gt.s32.totalorder %v282, 0
    %v284 = vsel %vm283, %v282, 0
    %v285 = vshrl.u32 %v284, 5
    %v286 = vand.u32 %v284, 31
    %v287 = vsub.s32 32, %v286
    %v288 = vshrl.u32 683565275, %v287
    %v289 = vshll.u32 683565275, %v286
    %v290 = vshrl.u32 2475754826, %v287
    %v291 = vor.u32 %v289, %v290
    %v292 = vshll.u32 2475754826, %v286
    %v293 = vshrl.u32 2131351028, %v287
    %v294 = vor.u32 %v292, %v293
    %v295 = vshll.u32 2131351028, %v286
    %v296 = vshrl.u32 2102212464, %v287
    %v297 = vor.u32 %v295, %v296
    %v298 = vshll.u32 2102212464, %v286
    %v299 = vshrl.u32 920167782, %v287
    %v300 = vor.u32 %v298, %v299
    %v301 = vshll.u32 920167782, %v286
    %v302 = vshrl.u32 1326507024, %v287
    %v303 = vor.u32 %v301, %v302
    %vm304 = vcmp.lt.s32.totalorder %v285, 1
    %vm305 = vcmp.lt.s32.totalorder %v285, 2
    %vm306 = vcmp.lt.s32.totalorder %v285, 3
    %vm307 = vcmp.lt.s32.totalorder %v285, 4
    %v308 = vsel %vm304, %v288, %v291
    %v309 = vsel %vm307, %v297, 2102212464
    %v310 = vsel %vm306, %v294, %v309
    %v311 = vsel %vm305, %v308, %v310
    %v312 = vsel %vm304, %v291, %v294
    %v313 = vsel %vm307, %v300, 920167782
    %v314 = vsel %vm306, %v297, %v313
    %v315 = vsel %vm305, %v312, %v314
    %v316 = vsel %vm304, %v294, %v297
    %v317 = vsel %vm307, %v303, 1326507024
    %v318 = vsel %vm306, %v300, %v317
    %v319 = vsel %vm305, %v316, %v318
    %v320 = vshll.u32 %v280, 8
    %v321 = vmul.u32.u64.compose %v320, %v319
    %v322 = vextract.low.u32 %v321
    %v323 = vextract.high.u32 %v321
    %v324 = vmul.u32.u64.compose %v320, %v315
    %v325 = vextract.low.u32 %v324
    %v326 = vextract.high.u32 %v324
    %v327 = vmul.u32 %v320, %v311
    %v328 = vadd.s32 %v323, %v325
    %vm329 = vc.u32 %v323, %v325
    %v330 = vadd.s32 %v326, 1
    %v331 = vsel %vm329, %v330, %v326
    %v332 = vadd.s32 %v327, %v331
    %v333 = vadd.s32 %v332, 536870912
    %v334 = vshrl.u32 %v333, 30
    %v335 = vshll.u32 %v334, 30
    %v336 = vsub.s32 %v332, %v335
    %vm337 = vcmp.lt.s32.totalorder %v336, 0
    %v338 = vsub.s32 0, %v336
    %v339 = vsel %vm337, %v338, %v336
    %v340 = vclz %v339
    %v341 = vsub.s32 %v340, 2
    %vm342 = vcmp.gt.s32.totalorder 0, %v341
    %v343 = vsel %vm342, 0, %v341
    %v344 = vsub.s32 32, %v343
    %v345 = vshll.u32 %v336, %v343
    %v346 = vshrl.u32 %v328, %v344
    %v347 = vor.u32 %v345, %v346
    %v348 = vsub.s32 4294967266, %v343
    %v349 = vadd.s32 %v348, 127
    %v350 = vshll.u32 %v349, 23
    %v351 = vor.u32 4788187, %v350
    %v352 = vand.u32 2147483647, %v351
    %v354 = vcvt.s32.f32 %v347
    %v355 = vmul.f32 %v354, %v352
    %v356 = vxor.u32 %v355, 2147483648
    %v357 = vsel %vm274, %v356, %v355
    %v358 = vsub.s32 4, %v334
    %v359 = vsel %vm274, %v358, %v334
    %v360 = vsel %vm273, %v165, %v357
    %v361 = vsel %vm273, 0, %v359
    %v362 = vcosq.f32.pop %v360
    %v363 = vsinq.f32.pop %v360
    %vm364 = vweird.f32 %v165
    %v365 = vadd.s32 %v361, 3
    %v366 = vand.u32 %v365, 3
    %vm367 = vcmp.lt.s32.totalorder %v366, 2
    %vm368 = vcmp.eq.s32.totalorder %v366, 0
    %v369 = vxor.u32 %v363, 2147483648
    %v370 = vsel %vm368, %v362, %v369
    %vm371 = vcmp.eq.s32.totalorder %v366, 2
    %v372 = vxor.u32 %v362, 2147483648
    %v373 = vsel %vm371, %v372, %v363
    %v374 = vsel %vm367, %v370, %v373
    %v375 = vsel %vm364, nan, %v374
    %v376 = vand.u32 2147483647, %v166
    %vm377 = vcmp.le.f32.partialorder %v376, 0.7853982
    %vm378 = vcmp.lt.s32.totalorder %v166, 0
    %v379 = vand.u32 %v166, 2139095040
    %v380 = vshrl.u32 %v379, 23
    %v381 = vsub.s32 %v380, 127
    %v382 = vand.u32 2147483647, %v166
    %v383 = vand.u32 %v382, 8388607
    %v384 = vor.u32 %v383, 8388608
    %v385 = vsub.s32 0, %v384
    %v386 = vadd.s32 %v381, 1
    %vm387 = vcmp.gt.s32.totalorder %v386, 0
    %v388 = vsel %vm387, %v386, 0
    %v389 = vshrl.u32 %v388, 5
    %v390 = vand.u32 %v388, 31
    %v391 = vsub.s32 32, %v390
    %v392 = vshrl.u32 683565275, %v391
    %v393 = vshll.u32 683565275, %v390
    %v394 = vshrl.u32 2475754826, %v391
    %v395 = vor.u32 %v393, %v394
    %v396 = vshll.u32 2475754826, %v390
    %v397 = vshrl.u32 2131351028, %v391
    %v398 = vor.u32 %v396, %v397
    %v399 = vshll.u32 2131351028, %v390
    %v400 = vshrl.u32 2102212464, %v391
    %v401 = vor.u32 %v399, %v400
    %v402 = vshll.u32 2102212464, %v390
    %v403 = vshrl.u32 920167782, %v391
    %v404 = vor.u32 %v402, %v403
    %v405 = vshll.u32 920167782, %v390
    %v406 = vshrl.u32 1326507024, %v391
    %v407 = vor.u32 %v405, %v406
    %vm408 = vcmp.lt.s32.totalorder %v389, 1
    %vm409 = vcmp.lt.s32.totalorder %v389, 2
    %vm410 = vcmp.lt.s32.totalorder %v389, 3
    %vm411 = vcmp.lt.s32.totalorder %v389, 4
    %v412 = vsel %vm408, %v392, %v395
    %v413 = vsel %vm411, %v401, 2102212464
    %v414 = vsel %vm410, %v398, %v413
    %v415 = vsel %vm409, %v412, %v414
    %v416 = vsel %vm408, %v395, %v398
    %v417 = vsel %vm411, %v404, 920167782
    %v418 = vsel %vm410, %v401, %v417
    %v419 = vsel %vm409, %v416, %v418
    %v420 = vsel %vm408, %v398, %v401
    %v421 = vsel %vm411, %v407, 1326507024
    %v422 = vsel %vm410, %v404, %v421
    %v423 = vsel %vm409, %v420, %v422
    %v424 = vshll.u32 %v384, 8
    %v425 = vmul.u32.u64.compose %v424, %v423
    %v426 = vextract.low.u32 %v425
    %v427 = vextract.high.u32 %v425
    %v428 = vmul.u32.u64.compose %v424, %v419
    %v429 = vextract.low.u32 %v428
    %v430 = vextract.high.u32 %v428
    %v431 = vmul.u32 %v424, %v415
    %v432 = vadd.s32 %v427, %v429
    %vm433 = vc.u32 %v427, %v429
    %v434 = vadd.s32 %v430, 1
    %v435 = vsel %vm433, %v434, %v430
    %v436 = vadd.s32 %v431, %v435
    %v437 = vadd.s32 %v436, 536870912
    %v438 = vshrl.u32 %v437, 30
    %v439 = vshll.u32 %v438, 30
    %v440 = vsub.s32 %v436, %v439
    %vm441 = vcmp.lt.s32.totalorder %v440, 0
    %v442 = vsub.s32 0, %v440
    %v443 = vsel %vm441, %v442, %v440
    %v444 = vclz %v443
    %v445 = vsub.s32 %v444, 2
    %vm446 = vcmp.gt.s32.totalorder 0, %v445
    %v447 = vsel %vm446, 0, %v445
    %v448 = vsub.s32 32, %v447
    %v449 = vshll.u32 %v440, %v447
    %v450 = vshrl.u32 %v432, %v448
    %v451 = vor.u32 %v449, %v450
    %v452 = vsub.s32 4294967266, %v447
    %v453 = vadd.s32 %v452, 127
    %v454 = vshll.u32 %v453, 23
    %v455 = vor.u32 4788187, %v454
    %v456 = vand.u32 2147483647, %v455
    %v458 = vcvt.s32.f32 %v451
    %v459 = vmul.f32 %v458, %v456
    %v460 = vxor.u32 %v459, 2147483648
    %v461 = vsel %vm378, %v460, %v459
    %v462 = vsub.s32 4, %v438
    %v463 = vsel %vm378, %v462, %v438
    %v464 = vsel %vm377, %v166, %v461
    %v465 = vsel %vm377, 0, %v463
    %v466 = vcosq.f32.pop %v464
    %v467 = vsinq.f32.pop %v464
    %vm468 = vweird.f32 %v166
    %v469 = vadd.s32 %v465, 3
    %v470 = vand.u32 %v469, 3
    %vm471 = vcmp.lt.s32.totalorder %v470, 2
    %vm472 = vcmp.eq.s32.totalorder %v470, 0
    %v473 = vxor.u32 %v467, 2147483648
    %v474 = vsel %vm472, %v466, %v473
    %vm475 = vcmp.eq.s32.totalorder %v470, 2
    %v476 = vxor.u32 %v466, 2147483648
    %v477 = vsel %vm475, %v476, %v467
    %v478 = vsel %vm471, %v474, %v477
    %v479 = vsel %vm468, nan, %v478
    %v480 = vand.u32 2147483647, %v167
    %vm481 = vcmp.le.f32.partialorder %v480, 0.7853982
    %vm482 = vcmp.lt.s32.totalorder %v167, 0
    %v483 = vand.u32 %v167, 2139095040
    %v484 = vshrl.u32 %v483, 23
    %v485 = vsub.s32 %v484, 127
    %v486 = vand.u32 2147483647, %v167
    %v487 = vand.u32 %v486, 8388607
    %v488 = vor.u32 %v487, 8388608
    %v489 = vsub.s32 0, %v488
    %v490 = vadd.s32 %v485, 1
    %vm491 = vcmp.gt.s32.totalorder %v490, 0
    %v492 = vsel %vm491, %v490, 0
    %v493 = vshrl.u32 %v492, 5
    %v494 = vand.u32 %v492, 31
    %v495 = vsub.s32 32, %v494
    %v496 = vshrl.u32 683565275, %v495
    %v497 = vshll.u32 683565275, %v494
    %v498 = vshrl.u32 2475754826, %v495
    %v499 = vor.u32 %v497, %v498
    %v500 = vshll.u32 2475754826, %v494
    %v501 = vshrl.u32 2131351028, %v495
    %v502 = vor.u32 %v500, %v501
    %v503 = vshll.u32 2131351028, %v494
    %v504 = vshrl.u32 2102212464, %v495
    %v505 = vor.u32 %v503, %v504
    %v506 = vshll.u32 2102212464, %v494
    %v507 = vshrl.u32 920167782, %v495
    %v508 = vor.u32 %v506, %v507
    %v509 = vshll.u32 920167782, %v494
    %v510 = vshrl.u32 1326507024, %v495
    %v511 = vor.u32 %v509, %v510
    %vm512 = vcmp.lt.s32.totalorder %v493, 1
    %vm513 = vcmp.lt.s32.totalorder %v493, 2
    %vm514 = vcmp.lt.s32.totalorder %v493, 3
    %vm515 = vcmp.lt.s32.totalorder %v493, 4
    %v516 = vsel %vm512, %v496, %v499
    %v517 = vsel %vm515, %v505, 2102212464
    %v518 = vsel %vm514, %v502, %v517
    %v519 = vsel %vm513, %v516, %v518
    %v520 = vsel %vm512, %v499, %v502
    %v521 = vsel %vm515, %v508, 920167782
    %v522 = vsel %vm514, %v505, %v521
    %v523 = vsel %vm513, %v520, %v522
    %v524 = vsel %vm512, %v502, %v505
    %v525 = vsel %vm515, %v511, 1326507024
    %v526 = vsel %vm514, %v508, %v525
    %v527 = vsel %vm513, %v524, %v526
    %v528 = vshll.u32 %v488, 8
    %v529 = vmul.u32.u64.compose %v528, %v527
    %v530 = vextract.low.u32 %v529
    %v531 = vextract.high.u32 %v529
    %v532 = vmul.u32.u64.compose %v528, %v523
    %v533 = vextract.low.u32 %v532
    %v534 = vextract.high.u32 %v532
    %v535 = vmul.u32 %v528, %v519
    %v536 = vadd.s32 %v531, %v533
    %vm537 = vc.u32 %v531, %v533
    %v538 = vadd.s32 %v534, 1
    %v539 = vsel %vm537, %v538, %v534
    %v540 = vadd.s32 %v535, %v539
    %v541 = vadd.s32 %v540, 536870912
    %v542 = vshrl.u32 %v541, 30
    %v543 = vshll.u32 %v542, 30
    %v544 = vsub.s32 %v540, %v543
    %vm545 = vcmp.lt.s32.totalorder %v544, 0
    %v546 = vsub.s32 0, %v544
    %v547 = vsel %vm545, %v546, %v544
    %v548 = vclz %v547
    %v549 = vsub.s32 %v548, 2
    %vm550 = vcmp.gt.s32.totalorder 0, %v549
    %v551 = vsel %vm550, 0, %v549
    %v552 = vsub.s32 32, %v551
    %v553 = vshll.u32 %v544, %v551
    %v554 = vshrl.u32 %v536, %v552
    %v555 = vor.u32 %v553, %v554
    %v556 = vsub.s32 4294967266, %v551
    %v557 = vadd.s32 %v556, 127
    %v558 = vshll.u32 %v557, 23
    %v559 = vor.u32 4788187, %v558
    %v560 = vand.u32 2147483647, %v559
    %v562 = vcvt.s32.f32 %v555
    %v563 = vmul.f32 %v562, %v560
    %v564 = vxor.u32 %v563, 2147483648
    %v565 = vsel %vm482, %v564, %v563
    %v566 = vsub.s32 4, %v542
    %v567 = vsel %vm482, %v566, %v542
    %v568 = vsel %vm481, %v167, %v565
    %v569 = vsel %vm481, 0, %v567
    %v570 = vcosq.f32.pop %v568
    %v571 = vsinq.f32.pop %v568
    %vm572 = vweird.f32 %v167
    %v573 = vadd.s32 %v569, 3
    %v574 = vand.u32 %v573, 3
    %vm575 = vcmp.lt.s32.totalorder %v574, 2
    %vm576 = vcmp.eq.s32.totalorder %v574, 0
    %v577 = vxor.u32 %v571, 2147483648
    %v578 = vsel %vm576, %v570, %v577
    %vm579 = vcmp.eq.s32.totalorder %v574, 2
    %v580 = vxor.u32 %v570, 2147483648
    %v581 = vsel %vm579, %v580, %v571
    %v582 = vsel %vm575, %v578, %v581
    %v583 = vsel %vm572, nan, %v582
    %v584 = vpack.c.bf16 %v479, %v271
    %v585 = vpack.c.bf16 %v583, %v375
    %v586 = vlaneseq
    %v587 = vshrl.u32 %v586, 7
    %v588 = vsub.s32 2, %v587
    %v589 = vrot.slane %v46, %v588
    %v590 = vlaneseq
    %v591 = vshrl.u32 %v590, 7
    %v592 = vsub.s32 6, %v591
    %v593 = vrot.slane %v46, %v592
    %v596 = vlaneseq
    %v597 = vshrl.u32 %v596, 7
    %v598 = vsub.s32 2, %v597
    %v599 = vrot.slane %v589, %v598
    %v600 = vlaneseq
    %v601 = vshrl.u32 %v600, 7
    %v602 = vsub.s32 2, %v601
    %v603 = vrot.slane %v593, %v602
    %v636 = vunpack.c.l.b16 %v47
    %v637 = vunpack.c.h.b16 %v47
    %v638 = vunpack.c.l.b16 %v48
    %v639 = vunpack.c.h.b16 %v48
    %v640 = vunpack.c.l.b16 %v49
    %v641 = vunpack.c.h.b16 %v49
    %v642 = vunpack.c.l.b16 %v50
    %v643 = vunpack.c.h.b16 %v50
    %v644 = vunpack.c.l.b16 %v51
    %v645 = vunpack.c.h.b16 %v51
    %v646 = vunpack.c.l.b16 %v52
    %v647 = vunpack.c.h.b16 %v52
    %v648 = vunpack.c.l.b16 %v53
    %v649 = vunpack.c.h.b16 %v53
    %v650 = vunpack.c.l.b16 %v54
    %v651 = vunpack.c.h.b16 %v54
    %v652 = vunpack.c.l.b16 %v55
    %v653 = vunpack.c.h.b16 %v55
    %v654 = vunpack.c.l.b16 %v56
    %v655 = vunpack.c.h.b16 %v56
    %v656 = vunpack.c.l.b16 %v57
    %v657 = vunpack.c.h.b16 %v57
    %v658 = vunpack.c.l.b16 %v58
    %v659 = vunpack.c.h.b16 %v58
    %v660 = vunpack.c.l.b16 %v59
    %v661 = vunpack.c.h.b16 %v59
    %v662 = vunpack.c.l.b16 %v60
    %v663 = vunpack.c.h.b16 %v60
    %v664 = vunpack.c.l.b16 %v61
    %v665 = vunpack.c.h.b16 %v61
    %v666 = vunpack.c.l.b16 %v62
    %v667 = vunpack.c.h.b16 %v62
    %v668 = vunpack.c.l.b16 %v63
    %v669 = vunpack.c.h.b16 %v63
    %v670 = vunpack.c.l.b16 %v64
    %v671 = vunpack.c.h.b16 %v64
    %v672 = vunpack.c.l.b16 %v65
    %v673 = vunpack.c.h.b16 %v65
    %v674 = vunpack.c.l.b16 %v66
    %v675 = vunpack.c.h.b16 %v66
    %v676 = vunpack.c.l.b16 %v67
    %v677 = vunpack.c.h.b16 %v67
    %v678 = vunpack.c.l.b16 %v68
    %v679 = vunpack.c.h.b16 %v68
    %v680 = vunpack.c.l.b16 %v69
    %v681 = vunpack.c.h.b16 %v69
    %v682 = vunpack.c.l.b16 %v70
    %v683 = vunpack.c.h.b16 %v70
    %v684 = vunpack.c.l.b16 %v71
    %v685 = vunpack.c.h.b16 %v71
    %v686 = vunpack.c.l.b16 %v72
    %v687 = vunpack.c.h.b16 %v72
    %v688 = vunpack.c.l.b16 %v73
    %v689 = vunpack.c.h.b16 %v73
    %v690 = vunpack.c.l.b16 %v74
    %v691 = vunpack.c.h.b16 %v74
    %v692 = vunpack.c.l.b16 %v75
    %v693 = vunpack.c.h.b16 %v75
    %v694 = vunpack.c.l.b16 %v76
    %v695 = vunpack.c.h.b16 %v76
    %v696 = vunpack.c.l.b16 %v77
    %v697 = vunpack.c.h.b16 %v77
    %v698 = vunpack.c.l.b16 %v78
    %v699 = vunpack.c.h.b16 %v78
    %v700 = vpack.c.b16 %v638, %v636
    %v701 = vpack.c.b16 %v639, %v637
    %v702 = vpack.c.b16 %v642, %v640
    %v703 = vpack.c.b16 %v643, %v641
    %v704 = vpack.c.b16 %v646, %v644
    %v705 = vpack.c.b16 %v647, %v645
    %v706 = vpack.c.b16 %v650, %v648
    %v707 = vpack.c.b16 %v651, %v649
    %v708 = vpack.c.b16 %v654, %v652
    %v709 = vpack.c.b16 %v655, %v653
    %v710 = vpack.c.b16 %v658, %v656
    %v711 = vpack.c.b16 %v659, %v657
    %v712 = vpack.c.b16 %v662, %v660
    %v713 = vpack.c.b16 %v663, %v661
    %v714 = vpack.c.b16 %v666, %v664
    %v715 = vpack.c.b16 %v667, %v665
    %v716 = vpack.c.b16 %v670, %v668
    %v717 = vpack.c.b16 %v671, %v669
    %v718 = vpack.c.b16 %v674, %v672
    %v719 = vpack.c.b16 %v675, %v673
    %v720 = vpack.c.b16 %v678, %v676
    %v721 = vpack.c.b16 %v679, %v677
    %v722 = vpack.c.b16 %v682, %v680
    %v723 = vpack.c.b16 %v683, %v681
    %v724 = vpack.c.b16 %v686, %v684
    %v725 = vpack.c.b16 %v687, %v685
    %v726 = vpack.c.b16 %v690, %v688
    %v727 = vpack.c.b16 %v691, %v689
    %v728 = vpack.c.b16 %v694, %v692
    %v729 = vpack.c.b16 %v695, %v693
    %v730 = vpack.c.b16 %v698, %v696
    %v731 = vpack.c.b16 %v699, %v697
    %764 = vmatprep.subr.bf16.mxu0 %v701
    %765 = vmatpush1.bf16.msra.mxu0 %v700
    %766 = vmatprep.subr.bf16.mxu0 %v703
    %767 = vmatpush1.bf16.msra.mxu0 %v702
    %768 = vmatprep.subr.bf16.mxu0 %v705
    %769 = vmatpush1.bf16.msra.mxu0 %v704
    %770 = vmatprep.subr.bf16.mxu0 %v707
    %771 = vmatpush1.bf16.msra.mxu0 %v706
    %772 = vmatprep.subr.bf16.mxu0 %v709
    %773 = vmatpush1.bf16.msra.mxu0 %v708
    %774 = vmatprep.subr.bf16.mxu0 %v711
    %775 = vmatpush1.bf16.msra.mxu0 %v710
    %776 = vmatprep.subr.bf16.mxu0 %v713
    %777 = vmatpush1.bf16.msra.mxu0 %v712
    %778 = vmatprep.subr.bf16.mxu0 %v715
    %779 = vmatpush1.bf16.msra.mxu0 %v714
    %780 = vmatprep.subr.bf16.mxu0 %v717
    %781 = vmatpush1.bf16.msra.mxu0 %v716
    %782 = vmatprep.subr.bf16.mxu0 %v719
    %783 = vmatpush1.bf16.msra.mxu0 %v718
    %784 = vmatprep.subr.bf16.mxu0 %v721
    %785 = vmatpush1.bf16.msra.mxu0 %v720
    %786 = vmatprep.subr.bf16.mxu0 %v723
    %787 = vmatpush1.bf16.msra.mxu0 %v722
    %788 = vmatprep.subr.bf16.mxu0 %v725
    %789 = vmatpush1.bf16.msra.mxu0 %v724
    %790 = vmatprep.subr.bf16.mxu0 %v727
    %791 = vmatpush1.bf16.msra.mxu0 %v726
    %792 = vmatprep.subr.bf16.mxu0 %v729
    %793 = vmatpush1.bf16.msra.mxu0 %v728
    %794 = vmatprep.subr.bf16.mxu0 %v731
    %795 = vmatpush1.bf16.msra.mxu0 %v730
    %796 = vmatprep.mubr.bf16.mxu0 %v585
    %797 = vmatmul.mubr.bf16.gmra.mrb[0].mxu0 %v584
    %v798 = vpop.f32.mrb[0].mxu0
    %v799 = vadd.f32 %v599, %v798
    %v800 = vpop.f32.mrb[0].mxu0
    %v801 = vadd.f32 %v603, %v800
    %v802 = vpop.f32.mrb[0].mxu0
    %v803 = vadd.f32 %v599, %v802
    %v804 = vpop.f32.mrb[0].mxu0
    %v805 = vadd.f32 %v603, %v804
    %806 = vdwg.mxu0
    %v807 = vmax.f32 %v799, 0.0
    %v808 = vmax.f32 %v801, 0.0
    %v809 = vmax.f32 %v803, 0.0
    %v810 = vmax.f32 %v805, 0.0
    %v811 = vpack.c.bf16 %v809, %v807
    %v812 = vpack.c.bf16 %v810, %v808
    %v813 = vlaneseq
    %v814 = vshrl.u32 %v813, 7
    %v815 = vsub.s32 3, %v814
    %v816 = vrot.slane %v46, %v815
    %v817 = vlaneseq
    %v818 = vshrl.u32 %v817, 7
    %v819 = vsub.s32 7, %v818
    %v820 = vrot.slane %v46, %v819
    %v823 = vlaneseq
    %v824 = vshrl.u32 %v823, 7
    %v825 = vsub.s32 3, %v824
    %v826 = vrot.slane %v816, %v825
    %v827 = vlaneseq
    %v828 = vshrl.u32 %v827, 7
    %v829 = vsub.s32 3, %v828
    %v830 = vrot.slane %v820, %v829
    %v863 = vunpack.c.l.b16 %v79
    %v864 = vunpack.c.h.b16 %v79
    %v865 = vunpack.c.l.b16 %v80
    %v866 = vunpack.c.h.b16 %v80
    %v867 = vunpack.c.l.b16 %v81
    %v868 = vunpack.c.h.b16 %v81
    %v869 = vunpack.c.l.b16 %v82
    %v870 = vunpack.c.h.b16 %v82
    %v871 = vunpack.c.l.b16 %v83
    %v872 = vunpack.c.h.b16 %v83
    %v873 = vunpack.c.l.b16 %v84
    %v874 = vunpack.c.h.b16 %v84
    %v875 = vunpack.c.l.b16 %v85
    %v876 = vunpack.c.h.b16 %v85
    %v877 = vunpack.c.l.b16 %v86
    %v878 = vunpack.c.h.b16 %v86
    %v879 = vunpack.c.l.b16 %v87
    %v880 = vunpack.c.h.b16 %v87
    %v881 = vunpack.c.l.b16 %v88
    %v882 = vunpack.c.h.b16 %v88
    %v883 = vunpack.c.l.b16 %v89
    %v884 = vunpack.c.h.b16 %v89
    %v885 = vunpack.c.l.b16 %v90
    %v886 = vunpack.c.h.b16 %v90
    %v887 = vunpack.c.l.b16 %v91
    %v888 = vunpack.c.h.b16 %v91
    %v889 = vunpack.c.l.b16 %v92
    %v890 = vunpack.c.h.b16 %v92
    %v891 = vunpack.c.l.b16 %v93
    %v892 = vunpack.c.h.b16 %v93
    %v893 = vunpack.c.l.b16 %v94
    %v894 = vunpack.c.h.b16 %v94
    %v895 = vunpack.c.l.b16 %v95
    %v896 = vunpack.c.h.b16 %v95
    %v897 = vunpack.c.l.b16 %v96
    %v898 = vunpack.c.h.b16 %v96
    %v899 = vunpack.c.l.b16 %v97
    %v900 = vunpack.c.h.b16 %v97
    %v901 = vunpack.c.l.b16 %v98
    %v902 = vunpack.c.h.b16 %v98
    %v903 = vunpack.c.l.b16 %v99
    %v904 = vunpack.c.h.b16 %v99
    %v905 = vunpack.c.l.b16 %v100
    %v906 = vunpack.c.h.b16 %v100
    %v907 = vunpack.c.l.b16 %v101
    %v908 = vunpack.c.h.b16 %v101
    %v909 = vunpack.c.l.b16 %v102
    %v910 = vunpack.c.h.b16 %v102
    %v911 = vunpack.c.l.b16 %v103
    %v912 = vunpack.c.h.b16 %v103
    %v913 = vunpack.c.l.b16 %v104
    %v914 = vunpack.c.h.b16 %v104
    %v915 = vunpack.c.l.b16 %v105
    %v916 = vunpack.c.h.b16 %v105
    %v917 = vunpack.c.l.b16 %v106
    %v918 = vunpack.c.h.b16 %v106
    %v919 = vunpack.c.l.b16 %v107
    %v920 = vunpack.c.h.b16 %v107
    %v921 = vunpack.c.l.b16 %v108
    %v922 = vunpack.c.h.b16 %v108
    %v923 = vunpack.c.l.b16 %v109
    %v924 = vunpack.c.h.b16 %v109
    %v925 = vunpack.c.l.b16 %v110
    %v926 = vunpack.c.h.b16 %v110
    %v927 = vpack.c.b16 %v865, %v863
    %v928 = vpack.c.b16 %v866, %v864
    %v929 = vpack.c.b16 %v869, %v867
    %v930 = vpack.c.b16 %v870, %v868
    %v931 = vpack.c.b16 %v873, %v871
    %v932 = vpack.c.b16 %v874, %v872
    %v933 = vpack.c.b16 %v877, %v875
    %v934 = vpack.c.b16 %v878, %v876
    %v935 = vpack.c.b16 %v881, %v879
    %v936 = vpack.c.b16 %v882, %v880
    %v937 = vpack.c.b16 %v885, %v883
    %v938 = vpack.c.b16 %v886, %v884
    %v939 = vpack.c.b16 %v889, %v887
    %v940 = vpack.c.b16 %v890, %v888
    %v941 = vpack.c.b16 %v893, %v891
    %v942 = vpack.c.b16 %v894, %v892
    %v943 = vpack.c.b16 %v897, %v895
    %v944 = vpack.c.b16 %v898, %v896
    %v945 = vpack.c.b16 %v901, %v899
    %v946 = vpack.c.b16 %v902, %v900
    %v947 = vpack.c.b16 %v905, %v903
    %v948 = vpack.c.b16 %v906, %v904
    %v949 = vpack.c.b16 %v909, %v907
    %v950 = vpack.c.b16 %v910, %v908
    %v951 = vpack.c.b16 %v913, %v911
    %v952 = vpack.c.b16 %v914, %v912
    %v953 = vpack.c.b16 %v917, %v915
    %v954 = vpack.c.b16 %v918, %v916
    %v955 = vpack.c.b16 %v921, %v919
    %v956 = vpack.c.b16 %v922, %v920
    %v957 = vpack.c.b16 %v925, %v923
    %v958 = vpack.c.b16 %v926, %v924
    %991 = vmatprep.subr.bf16.mxu0 %v928
    %992 = vmatpush1.bf16.msra.mxu0 %v927
    %993 = vmatprep.subr.bf16.mxu0 %v930
    %994 = vmatpush1.bf16.msra.mxu0 %v929
    %995 = vmatprep.subr.bf16.mxu0 %v932
    %996 = vmatpush1.bf16.msra.mxu0 %v931
    %997 = vmatprep.subr.bf16.mxu0 %v934
    %998 = vmatpush1.bf16.msra.mxu0 %v933
    %999 = vmatprep.subr.bf16.mxu0 %v936
    %1000 = vmatpush1.bf16.msra.mxu0 %v935
    %1001 = vmatprep.subr.bf16.mxu0 %v938
    %1002 = vmatpush1.bf16.msra.mxu0 %v937
    %1003 = vmatprep.subr.bf16.mxu0 %v940
    %1004 = vmatpush1.bf16.msra.mxu0 %v939
    %1005 = vmatprep.subr.bf16.mxu0 %v942
    %1006 = vmatpush1.bf16.msra.mxu0 %v941
    %1007 = vmatprep.subr.bf16.mxu0 %v944
    %1008 = vmatpush1.bf16.msra.mxu0 %v943
    %1009 = vmatprep.subr.bf16.mxu0 %v946
    %1010 = vmatpush1.bf16.msra.mxu0 %v945
    %1011 = vmatprep.subr.bf16.mxu0 %v948
    %1012 = vmatpush1.bf16.msra.mxu0 %v947
    %1013 = vmatprep.subr.bf16.mxu0 %v950
    %1014 = vmatpush1.bf16.msra.mxu0 %v949
    %1015 = vmatprep.subr.bf16.mxu0 %v952
    %1016 = vmatpush1.bf16.msra.mxu0 %v951
    %1017 = vmatprep.subr.bf16.mxu0 %v954
    %1018 = vmatpush1.bf16.msra.mxu0 %v953
    %1019 = vmatprep.subr.bf16.mxu0 %v956
    %1020 = vmatpush1.bf16.msra.mxu0 %v955
    %1021 = vmatprep.subr.bf16.mxu0 %v958
    %1022 = vmatpush1.bf16.msra.mxu0 %v957
    %1023 = vmatprep.mubr.bf16.mxu0 %v812
    %1024 = vmatmul.mubr.bf16.gmra.mrb[0].mxu0 %v811
    %v1025 = vpop.f32.mrb[0].mxu0
    %v1026 = vadd.f32 %v826, %v1025
    %v1027 = vpop.f32.mrb[0].mxu0
    %v1028 = vadd.f32 %v830, %v1027
    %v1029 = vpop.f32.mrb[0].mxu0
    %v1030 = vadd.f32 %v826, %v1029
    %v1031 = vpop.f32.mrb[0].mxu0
    %v1032 = vadd.f32 %v830, %v1031
    %1033 = vdwg.mxu0
    %1034 = vst [vmem:[#allocation7] sm:$0xff] %v1026
    %1035 = vst [vmem:[#allocation7 + $0x8] sm:$0xff] %v1028
    %1036 = vst [vmem:[#allocation7 + $0x10] sm:$0xff] %v1030
    %1037 = vst [vmem:[#allocation7 + $0x18] sm:$0xff] %v1032
    // Predicated region
    $region26: #{tpu_custom_call.1} parent=1 // pred_check
      _
    $region27: #{tpu_custom_call.1} parent=1 // pred_check_branch
      %1039 = sbr.rel (0) target = $region29
    $region28: #{tpu_custom_call.1} parent=1 // pred_region
      %s1041 = ssub.s32 512, 512
      %1042 = vsyncadd [#allocation4], %s1041
      %s1043 = sshll.u32 [#allocation7], 4
      %s1044 = int_to_ptr.vmem [resolvable:$true] %s1043
      %1049 = dma.vmem_to_hbm [thread:$0]  %s1044, 512, %s4, [#allocation4], 256, 256, 16
    $region29: #{tpu_custom_call.1} parent=1 // pred_fallthru
      _
    // Predicated region
    $region30: #{tpu_custom_call.1} parent=1 // pred_check
      _
    $region31: #{tpu_custom_call.1} parent=1 // pred_check_branch
      %1051 = sbr.rel (0) target = $region33
    $region32: #{tpu_custom_call.1} parent=1 // pred_region
      %1052 = dma.done [#allocation4], 512
    $region33: #{tpu_custom_call.1} parent=1 // pred_fallthru
      _
    %1053 = vsyncpa [#allocation3], 1
    %1054 = vsyncpa [#allocation6], 1
    %1055 = vsyncpa [#allocation4], 1

</llo_original>
